<compile_context>
chip_gen: v7x
topology: tpu7x:2x2x1
jax: 0.10.0
libtpu: 0.0.40
codegen_flags: <defaults>
</compile_context>

<pallas_src>
import jax
import jax.numpy as jnp
from jax import lax
from jax.experimental import pallas as pl
from jax.experimental.pallas import tpu as pltpu


def embed_kernel(ids_ref, emb_ref, pos_ref, out_ref):
    # ids_ref : VMEM (CH, 1) int32  -- token ids for this row chunk (s-major flat)
    # emb_ref : VMEM (V, H)  f32    -- full vocab table, resident across grid steps
    # pos_ref : VMEM (CH, H) f32    -- per-row positional rows for this chunk
    # out_ref : VMEM (CH, H) f32    -- output rows for this chunk
    ch = out_ref.shape[0]
    vocab = emb_ref.shape[0]

    ids = ids_ref[...]                                            # (CH, 1)
    vocab_iota = lax.broadcasted_iota(jnp.int32, (ch, vocab), 1)  # (CH, V)
    # Exact one-hot gather on the MXU: 0/1 rows times the f32 table is exact.
    # NOTE: out-of-range ids produce an all-zero token row (PyTorch nn.Embedding
    # would raise); inputs are trusted here.
    one_hot = (ids == vocab_iota).astype(emb_ref.dtype)           # (CH, V)
    gathered = jnp.dot(one_hot, emb_ref[...],
                       preferred_element_type=jnp.float32)        # (CH, H)
    out_ref[...] = (gathered + pos_ref[...]).astype(out_ref.dtype)


def _pick_chunk(rows):
    """Largest multiple-of-8 divisor of `rows` that is <= min(256, rows//2),
    so we get sublane-dense blocks and >=2 grid steps when possible."""
    cap = min(256, max(rows // 2, 8))
    best = None
    for c in range(8, cap + 1, 8):
        if rows % c == 0:
            best = c
    return best if best is not None else rows


def embed_forward(token_ids, emb_table, pos_table):
    """token_ids: (S, B) int32; emb_table: (V, H) f32; pos_table: (S, H) f32.
    Returns (S, B, H) f32, matching the PyTorch forward semantics."""
    S, B = token_ids.shape
    V, H = emb_table.shape
    assert pos_table.shape == (S, H)
    # TODO(synk): for large vocabularies (V*H beyond a few MiB of VMEM) switch
    # to a chunked HBM row-gather path instead of the resident one-hot matmul.

    rows = S * B
    chunk = _pick_chunk(rows)
    grid = (rows // chunk,)

    ids_flat = token_ids.reshape(rows, 1).astype(jnp.int32)   # s-major flat ids
    # Per-row positional layout: row r = s*B + b needs pos[s].
    pos_rows = jnp.repeat(pos_table, B, axis=0)               # (S*B, H), tiny

    out_flat = pl.pallas_call(
        embed_kernel,
        out_shape=jax.ShapeDtypeStruct((rows, H), emb_table.dtype),
        grid=grid,
        in_specs=[
            pl.BlockSpec((chunk, 1), lambda i: (i, 0)),   # token ids (chunked)
            pl.BlockSpec((V, H), lambda i: (0, 0)),       # vocab table (resident)
            pl.BlockSpec((chunk, H), lambda i: (i, 0)),   # positional rows (chunked)
        ],
        out_specs=pl.BlockSpec((chunk, H), lambda i: (i, 0)),
        compiler_params=pltpu.CompilerParams(
            dimension_semantics=("parallel",)),
    )(ids_flat, emb_table, pos_rows)

    return out_flat.reshape(S, B, H)


if __name__ == "__main__":
    # Small shapes consistent with the module's forward pass.
    input_size = 32    # vocab size V
    hidden_size = 32   # H
    max_length = 8     # S (sequence length == max_length per forward)
    batch = 2          # B

    key = jax.random.PRNGKey(0)
    k_emb, k_pos, k_ids = jax.random.split(key, 3)

    # nn.Embedding default init: weights ~ N(0, 1).
    emb_table = jax.random.normal(k_emb, (input_size, hidden_size), dtype=jnp.float32)
    pos_table = jax.random.normal(k_pos, (max_length, hidden_size), dtype=jnp.float32)
    token_ids = jax.random.randint(k_ids, (max_length, batch), 0, input_size,
                                   dtype=jnp.int32)

    out = embed_forward(token_ids, emb_table, pos_table)
    out = jax.block_until_ready(out)

    # Pure-JAX reference (same semantics as the PyTorch forward).
    ref = emb_table[token_ids] + pos_table[:, None, :]

    assert out.shape == (max_length, batch, hidden_size)
    assert jnp.allclose(out, ref, atol=1e-5, rtol=1e-5)
    print("KERNEL_OK")
</pallas_src>

<mosaic_0001>
module attributes {stable_mosaic.version = 11 : i64} {
  func.func @embed_kernel(%arg0: i32, %arg1: memref<8x1xi32, #tpu.memory_space<vmem>>, %arg2: memref<32x32xf32, #tpu.memory_space<vmem>>, %arg3: memref<8x32xf32, #tpu.memory_space<vmem>>, %arg4: memref<8x32xf32, #tpu.memory_space<vmem>>) attributes {dimension_semantics = [#tpu.dimension_semantics<parallel>], iteration_bounds = array<i64: 2>, scalar_prefetch = 0 : i64, scratch_operands = 0 : i64, tpu.core_type = #tpu.core_type<tc>, window_params = [{transform_indices = @transform_0, window_bounds = array<i64: 8, 1>}, {pipeline_mode = #tpu.pipeline_mode<synchronous>, transform_indices = @transform_1, window_bounds = array<i64: 32, 32>}, {transform_indices = @transform_2, window_bounds = array<i64: 8, 32>}, {transform_indices = @transform_3, window_bounds = array<i64: 8, 32>}]} {
    %c0 = arith.constant 0 : index
    %c0_0 = arith.constant 0 : index
    %0 = vector.load %arg1[%c0, %c0_0] : memref<8x1xi32, #tpu.memory_space<vmem>>, vector<8x1xi32>
    %1 = tpu.iota {dimensions = array<i32: 1>} : vector<8x32xi32>
    %2 = vector.broadcast %0 : vector<8x1xi32> to vector<8x32xi32>
    %3 = arith.cmpi eq, %2, %1 : vector<8x32xi32>
    %4 = arith.extui %3 : vector<8x32xi1> to vector<8x32xi32>
    %5 = arith.sitofp %4 : vector<8x32xi32> to vector<8x32xf32>
    %c0_1 = arith.constant 0 : index
    %c0_2 = arith.constant 0 : index
    %6 = vector.load %arg2[%c0_1, %c0_2] : memref<32x32xf32, #tpu.memory_space<vmem>>, vector<32x32xf32>
    %cst = arith.constant dense<0.000000e+00> : vector<8x32xf32>
    %7 = tpu.matmul %5, %6, %cst {dimension_numbers = #tpu.dot_dimension_numbers<[1], [0], [0], [1], [0, 0, 1, 1], [], []>} : vector<8x32xf32>, vector<32x32xf32>, vector<8x32xf32> -> vector<8x32xf32>
    %c0_3 = arith.constant 0 : index
    %c0_4 = arith.constant 0 : index
    %8 = vector.load %arg3[%c0_3, %c0_4] : memref<8x32xf32, #tpu.memory_space<vmem>>, vector<8x32xf32>
    %9 = arith.addf %7, %8 : vector<8x32xf32>
    %c0_5 = arith.constant 0 : index
    %c0_6 = arith.constant 0 : index
    %10 = vector.load %arg4[%c0_5, %c0_6] : memref<8x32xf32, #tpu.memory_space<vmem>>, vector<8x32xf32>
    tpu.vector_store %arg4[%c0_5, %c0_6], %9 {strides = array<i32>} : memref<8x32xf32, #tpu.memory_space<vmem>>, vector<8x32xf32>,
    return
  }
  func.func @transform_0(%arg0: i32) -> (i32, i32) {
    %c0_i32 = arith.constant 0 : i32
    %c0_i32_0 = arith.constant 0 : i32
    return %arg0, %c0_i32 : i32, i32
  }
  func.func @transform_1(%arg0: i32) -> (i32, i32) {
    %c0_i32 = arith.constant 0 : i32
    %c0_i32_0 = arith.constant 0 : i32
    %c0_i32_1 = arith.constant 0 : i32
    return %c0_i32, %c0_i32_0 : i32, i32
  }
  func.func @transform_2(%arg0: i32) -> (i32, i32) {
    %c0_i32 = arith.constant 0 : i32
    %c0_i32_0 = arith.constant 0 : i32
    return %arg0, %c0_i32 : i32, i32
  }
  func.func @transform_3(%arg0: i32) -> (i32, i32) {
    %c0_i32 = arith.constant 0 : i32
    %c0_i32_0 = arith.constant 0 : i32
    return %arg0, %c0_i32 : i32, i32
  }
}

</mosaic_0001>

<llo_original>
// kernel: tpu_custom_call.1
$region0: #{tpu_custom_call.1}
  #allocation0 [shape = 'u32[]', space=smem, size = 0x4, offset = 0x4, fixed_abs, tag = 'smem constant byte address 0x4 - core index']
  #allocation1 [shape = 'u32[144,128]{1,0:T(1,128)}', space=vmem, size = 0x12000, scoped, tag = 'internal scratch']
  %s0 = inlined_call_operand.vmem [shape: s32[16,1], index: 0, kind: input, shape index: {}]
  %s1 = inlined_call_operand.hbm [shape: f32[32,32], index: 1, kind: input, shape index: {}]
  %s2 = inlined_call_operand.vmem [shape: f32[16,32], index: 2, kind: input, shape index: {}]
  %s3 = inlined_call_operand.hbm [shape: f32[16,32], index: 3, kind: output, shape index: {}]
  %s4 = sld [smem:[#allocation0]]
  $region49: #{tpu_custom_call.1} parent=0
    _
  %s6 = ssub.s32 1, %s4
  %s7 = scalar_select 0, %s6, %s4
  $region1: #{tpu_custom_call.1} parent=0
    #allocation2 [shape = 'u8[16384]{0}', space=vmem, size = 0x4000, scoped, tag = 'input window, operand 1, single buffered']
    #allocation3 [shape = 's32[2]{0}', space=sflag, size = 0x8, scoped, tag = 'scoped memory for tpu_custom_call.1']
    #allocation4 [shape = 's32[2]{0}', space=sflag, size = 0x8, scoped, tag = 'scoped memory for tpu_custom_call.1']
    #allocation5 [shape = 'u8[8192]{0}', space=vmem, size = 0x2000, scoped, tag = 'output window, operand 0']
    %8 = vsyncpa [#allocation3], 0
    %9 = vsyncpa [#allocation4], 0
    %s10 = scalar_lea.sflag [#allocation4], 1
    %11 = vsyncpa %s10, 0
    loop: start=0, step=1, limit=4
    $region2: #{tpu_custom_call.1} parent=1 // loop_pre_header
      _
    $region3: #{tpu_custom_call.1} parent=1 // loop_header
      %s13 = sphi 0, %s17
      %p14 = scmp.ge.s32.totalorder %s13, 4
      %s23 = sphi 0, %s25
      %s26 = sphi 0, %s23
      %s27 = sphi 0, %s26
      %s43 = sphi 0, %s27
      %s47 = sphi 0, %s47
      %s49 = sphi 0, %s47
      %s50 = sphi 0, %s49
      %s64 = sphi 0, %s50
      %s70 = sphi 0, %s72
      %s73 = sphi 0, %s70
      %s74 = sphi 0, %s73
      %s90 = sphi 0, %s74
      %s96 = sphi 0, %s98
      %s99 = sphi 0, %s96
      %s100 = sphi 0, %s99
      %s116 = sphi 0, %s100
    $region4: #{tpu_custom_call.1} parent=1 // loop_header_branch
      %16 = sbr.rel (%p14) target = $region8
    $region5: #{tpu_custom_call.1} parent=1 // loop_body
      %s18 = ssub.s32 %s13, 1
      %s19 = ssub.s32 %s13, 2
      %s20 = sadd.s32 %s13, 1
      %s21 = ssub.s32 %s13, %s20
      %p22 = scmp.eq.s32.totalorder %s21, 0
      %s24 = sadd.s32 %s23, 1
      %s25 = scalar_select %p22, %s23, %s24
      %p28 = pneg %p22
      %p29 = scmp.eq.s32.totalorder %s13, 1
      %p30 = por %p28, %p29
      %p31 = scmp.ne.s32.totalorder %s23, %s26
      %p32 = scmp.eq.s32.totalorder %s13, 0
      %p33 = por %p31, %p32
      %p34 = scmp.ne.s32.totalorder %s23, %s26
      %p35 = scmp.eq.s32.totalorder %s18, 1
      %p36 = por %p34, %p35
      %p37 = scmp.ne.s32.totalorder %s26, %s27
      %p38 = scmp.eq.s32.totalorder %s18, 0
      %p39 = por %p37, %p38
      %p40 = scmp.ne.s32.totalorder %s26, %s27
      %p41 = scmp.eq.s32.totalorder %s19, 1
      %p42 = por %p40, %p41
      %p44 = scmp.ne.s32.totalorder %s27, %s43
      %p45 = scmp.eq.s32.totalorder %s19, 0
      %p46 = por %p44, %p45
      %s48 = sadd.s32 %s47, 1
      %p51 = scmp.eq.s32.totalorder %s13, 1
      %p52 = scmp.ne.s32.totalorder %s47, %s49
      %p53 = scmp.eq.s32.totalorder %s13, 0
      %p54 = por %p52, %p53
      %p55 = scmp.ne.s32.totalorder %s47, %s49
      %p56 = scmp.eq.s32.totalorder %s18, 1
      %p57 = por %p55, %p56
      %p58 = scmp.ne.s32.totalorder %s49, %s50
      %p59 = scmp.eq.s32.totalorder %s18, 0
      %p60 = por %p58, %p59
      %p61 = scmp.ne.s32.totalorder %s49, %s50
      %p62 = scmp.eq.s32.totalorder %s19, 1
      %p63 = por %p61, %p62
      %p65 = scmp.ne.s32.totalorder %s50, %s64
      %p66 = scmp.eq.s32.totalorder %s19, 0
      %p67 = por %p65, %p66
      %s68 = ssub.s32 %s13, %s20
      %p69 = scmp.eq.s32.totalorder %s68, 0
      %s71 = sadd.s32 %s70, 1
      %s72 = scalar_select %p69, %s70, %s71
      %p75 = pneg %p69
      %p76 = scmp.eq.s32.totalorder %s13, 1
      %p77 = por %p75, %p76
      %p78 = scmp.ne.s32.totalorder %s70, %s73
      %p79 = scmp.eq.s32.totalorder %s13, 0
      %p80 = por %p78, %p79
      %p81 = scmp.ne.s32.totalorder %s70, %s73
      %p82 = scmp.eq.s32.totalorder %s18, 1
      %p83 = por %p81, %p82
      %p84 = scmp.ne.s32.totalorder %s73, %s74
      %p85 = scmp.eq.s32.totalorder %s18, 0
      %p86 = por %p84, %p85
      %p87 = scmp.ne.s32.totalorder %s73, %s74
      %p88 = scmp.eq.s32.totalorder %s19, 1
      %p89 = por %p87, %p88
      %p91 = scmp.ne.s32.totalorder %s74, %s90
      %p92 = scmp.eq.s32.totalorder %s19, 0
      %p93 = por %p91, %p92
      %s94 = ssub.s32 %s13, %s20
      %p95 = scmp.eq.s32.totalorder %s94, 0
      %s97 = sadd.s32 %s96, 1
      %s98 = scalar_select %p95, %s96, %s97
      %p101 = pneg %p95
      %p102 = scmp.eq.s32.totalorder %s13, 1
      %p103 = por %p101, %p102
      %p104 = scmp.ne.s32.totalorder %s96, %s99
      %p105 = scmp.eq.s32.totalorder %s13, 0
      %p106 = por %p104, %p105
      %p107 = scmp.ne.s32.totalorder %s96, %s99
      %p108 = scmp.eq.s32.totalorder %s18, 1
      %p109 = por %p107, %p108
      %p110 = scmp.ne.s32.totalorder %s99, %s100
      %p111 = scmp.eq.s32.totalorder %s18, 0
      %p112 = por %p110, %p111
      %p113 = scmp.ne.s32.totalorder %s99, %s100
      %p114 = scmp.eq.s32.totalorder %s19, 1
      %p115 = por %p113, %p114
      %p117 = scmp.ne.s32.totalorder %s100, %s116
      %p118 = scmp.eq.s32.totalorder %s19, 0
      %p119 = por %p117, %p118
      %p120 = scmp.le.s32.totalorder 1, %s13
      %p121 = scmp.lt.s32.totalorder %s13, 3
      %p122 = pnand %p120, %p121
      %p123 = pneg %p122
      // Predicated region
      $region9: #{tpu_custom_call.1} parent=5 // pred_check
        _
      $region10: #{tpu_custom_call.1} parent=5 // pred_check_branch
        %125 = sbr.rel (%p122) target = $region12
      $region11: #{tpu_custom_call.1} parent=5 // pred_region
        %s126 = ssub.s32 %s13, 1
        // Predicated region
        $region13: #{tpu_custom_call.1} parent=11 // pred_check
          %p127 = pneg %p60
        $region14: #{tpu_custom_call.1} parent=11 // pred_check_branch
          %129 = sbr.rel (%p127) target = $region16
        $region15: #{tpu_custom_call.1} parent=11 // pred_region
          %s131 = ssub.s32 512, 512
          %132 = vsyncadd [#allocation3], %s131
          %s133 = sshll.u32 [#allocation2], 4
          %s134 = int_to_ptr.vmem [resolvable:$true] %s133
          %139 = dma.hbm_to_vmem [thread:$0]  %s1, 512, %s134, [#allocation3], 128, 128, 8
        $region16: #{tpu_custom_call.1} parent=11 // pred_fallthru
          _
      $region12: #{tpu_custom_call.1} parent=5 // pred_fallthru
        _
      %p140 = scmp.lt.s32.totalorder %s13, 2
      // Predicated region
      $region17: #{tpu_custom_call.1} parent=5 // pred_check
        %p141 = pneg %p140
      $region18: #{tpu_custom_call.1} parent=5 // pred_check_branch
        %143 = sbr.rel (%p141) target = $region20
      $region19: #{tpu_custom_call.1} parent=5 // pred_region
        // Predicated region
        $region21: #{tpu_custom_call.1} parent=19 // pred_check
          %p144 = pneg %p33
        $region22: #{tpu_custom_call.1} parent=19 // pred_check_branch
          %146 = sbr.rel (%p144) target = $region24
        $region23: #{tpu_custom_call.1} parent=19 // pred_region
          %p147 = scmp.lt.s32.totalorder %s13, 1
          %s148 = scalar_select %p147, %s13, 1
          %s149 = smul.addr %s148, 8
          %s150 = scalar_lea.vmem %s0, %s149
        $region24: #{tpu_custom_call.1} parent=19 // pred_fallthru
          _
        // Predicated region
        $region25: #{tpu_custom_call.1} parent=19 // pred_check
          %p151 = pneg %p80
        $region26: #{tpu_custom_call.1} parent=19 // pred_check_branch
          %153 = sbr.rel (%p151) target = $region28
        $region27: #{tpu_custom_call.1} parent=19 // pred_region
          %p154 = scmp.lt.s32.totalorder %s13, 1
          %s155 = scalar_select %p154, %s13, 1
          %s156 = smul.addr %s155, 8
          %s157 = scalar_lea.vmem %s2, %s156
        $region28: #{tpu_custom_call.1} parent=19 // pred_fallthru
          _
      $region20: #{tpu_custom_call.1} parent=5 // pred_fallthru
        _
      %p158 = scmp.le.s32.totalorder 1, %s13
      %p159 = scmp.lt.s32.totalorder %s13, 3
      %p160 = pnand %p158, %p159
      %p161 = pneg %p160
      // Predicated region
      $region29: #{tpu_custom_call.1} parent=5 // pred_check
        _
      $region30: #{tpu_custom_call.1} parent=5 // pred_check_branch
        %163 = sbr.rel (%p160) target = $region32
      $region31: #{tpu_custom_call.1} parent=5 // pred_region
        %s164 = ssub.s32 %s13, 1
        // Predicated region
        $region33: #{tpu_custom_call.1} parent=31 // pred_check
          %p165 = pneg %p60
        $region34: #{tpu_custom_call.1} parent=31 // pred_check_branch
          %167 = sbr.rel (%p165) target = $region36
        $region35: #{tpu_custom_call.1} parent=31 // pred_region
          %168 = dma.done [#allocation3], 512
        $region36: #{tpu_custom_call.1} parent=31 // pred_fallthru
          _
        %p169 = scmp.lt.s32.totalorder %s18, 1
        %s170 = scalar_select %p169, %s18, 1
        %s171 = smul.addr %s170, 8
        %s172 = scalar_lea.vmem %s0, %s171
        %p173 = pneg %p39
        %p174 = pneg %p36
        %p175 = pneg %p60
        %p176 = pneg %p57
        %p177 = scmp.lt.s32.totalorder %s18, 1
        %s178 = scalar_select %p177, %s18, 1
        %s179 = smul.addr %s178, 8
        %s180 = scalar_lea.vmem %s2, %s179
        %p181 = pneg %p86
        %p182 = pneg %p83
        %p183 = pneg %p112
        %p184 = pneg %p109
        %s185 = sand.u32 %s99, 1
        %s186 = scalar_lea.sflag [#allocation4], %s185
        %s187 = sand.u32 %s99, 1
        %s188 = smul.addr %s187, 8
        %s189 = scalar_lea.vmem [#allocation5], %s188
        %p190 = scmp.lt.s32.totalorder %s18, 1
        %s191 = scalar_select %p190, %s18, 1
        %s192 = smul.addr %s191, 8
        %s193 = scalar_lea.vmem %s0, %s192
        %p194 = scmp.lt.s32.totalorder %s18, 1
        %s195 = scalar_select %p194, %s18, 1
        %s196 = smul.addr %s195, 8
        %s197 = scalar_lea.vmem %s2, %s196
        %v198 = vld [vmem:[%s193] sm:$0xff]
        %v199 = vlaneseq
        %v200 = vand.u32 %v199, 127
        %201 = vset.pattern.permute.xlu0 0
        %202 = vperm.xlu0 %201, %v198
        %v203 = vpop.permute.xlu0 %202
        %vm204 = vcmp.eq.s32.totalorder %v203, %v200
        %v205 = vsel %vm204, 1, 0
        %v206 = vcvt.s32.f32 %v205
        %v207 = vld [vmem:[#allocation2] sm:$0xff]
        %v208 = vld [vmem:[#allocation2 + $0x8] sm:$0xff]
        %v209 = vld [vmem:[#allocation2 + $0x10] sm:$0xff]
        %v210 = vld [vmem:[#allocation2 + $0x18] sm:$0xff]
        %v211 = vld [vmem:[%s197] sm:$0xff]
        %vm212 = vcmask 261120
        %v214 = vsel %vm212, %v206, 0
        %216 = vmatprep.subr.mxu0 0.0
        %217 = vmatpush1.msra.mxu0 %v207
        %218 = vmatprep.subr.mxu0 0.0
        %219 = vmatpush1.msra.mxu0 %v208
        %220 = vmatprep.subr.mxu0 0.0
        %221 = vmatpush1.msra.mxu0 %v209
        %222 = vmatprep.subr.mxu0 0.0
        %223 = vmatpush1.msra.mxu0 %v210
        %224 = vmatprep.subr.mxu0 0.0
        %225 = vmatpush1.msra.mxu0 0.0
        %226 = vmatprep.subr.mxu0 0.0
        %227 = vmatpush1.msra.mxu0 0.0
        %228 = vmatprep.subr.mxu0 0.0
        %229 = vmatpush1.msra.mxu0 0.0
        %230 = vmatprep.subr.mxu0 0.0
        %231 = vmatpush1.msra.mxu0 0.0
        %232 = vmatprep.subr.mxu0 0.0
        %233 = vmatpush1.msra.mxu0 0.0
        %234 = vmatprep.subr.mxu0 0.0
        %235 = vmatpush1.msra.mxu0 0.0
        %236 = vmatprep.subr.mxu0 0.0
        %237 = vmatpush1.msra.mxu0 0.0
        %238 = vmatprep.subr.mxu0 0.0
        %239 = vmatpush1.msra.mxu0 0.0
        %240 = vmatprep.subr.mxu0 0.0
        %241 = vmatpush1.msra.mxu0 0.0
        %242 = vmatprep.subr.mxu0 0.0
        %243 = vmatpush1.msra.mxu0 0.0
        %244 = vmatprep.subr.mxu0 0.0
        %245 = vmatpush1.msra.mxu0 0.0
        %246 = vmatprep.subr.mxu0 0.0
        %247 = vmatpush1.msra.mxu0 0.0
        %248 = vmatprep.subr.mxu0 0.0
        %249 = vmatpush1.msra.mxu0 0.0
        %250 = vmatprep.subr.mxu0 0.0
        %251 = vmatpush1.msra.mxu0 0.0
        %252 = vmatprep.subr.mxu0 0.0
        %253 = vmatpush1.msra.mxu0 0.0
        %254 = vmatprep.subr.mxu0 0.0
        %255 = vmatpush1.msra.mxu0 0.0
        %256 = vmatprep.subr.mxu0 0.0
        %257 = vmatpush1.msra.mxu0 0.0
        %258 = vmatprep.subr.mxu0 0.0
        %259 = vmatpush1.msra.mxu0 0.0
        %260 = vmatprep.subr.mxu0 0.0
        %261 = vmatpush1.msra.mxu0 0.0
        %262 = vmatprep.subr.mxu0 0.0
        %263 = vmatpush1.msra.mxu0 0.0
        %264 = vmatprep.subr.mxu0 0.0
        %265 = vmatpush1.msra.mxu0 0.0
        %266 = vmatprep.subr.mxu0 0.0
        %267 = vmatpush1.msra.mxu0 0.0
        %268 = vmatprep.subr.mxu0 0.0
        %269 = vmatpush1.msra.mxu0 0.0
        %270 = vmatprep.subr.mxu0 0.0
        %271 = vmatpush1.msra.mxu0 0.0
        %272 = vmatprep.subr.mxu0 0.0
        %273 = vmatpush1.msra.mxu0 0.0
        %274 = vmatprep.subr.mxu0 0.0
        %275 = vmatpush1.msra.mxu0 0.0
        %276 = vmatprep.subr.mxu0 0.0
        %277 = vmatpush1.msra.mxu0 0.0
        %278 = vmatprep.subr.mxu0 0.0
        %279 = vmatpush1.msra.mxu0 0.0
        %280 = vmatprep.mubr.f32.mxu0 0.0
        %281 = vmatmul.mubr.f32.gmra.mrb[0].mxu0 %v214
        %v282 = vpop.f32.mrb[0].mxu0
        %v283 = vadd.f32 %v211, %v282
        %v284 = vpop.f32.mrb[0].mxu0
        %285 = vdwg.mxu0
        %286 = vst.msk [vmem:[%s189] sm:$0xff] %vm212, %v283
        %s287 = sand.u32 %s99, 1
        %s288 = scalar_lea.sflag [#allocation4], %s287
        %s289 = sand.u32 %s99, 1
        %s290 = smul.addr %s289, 8
        %s291 = scalar_lea.vmem [#allocation5], %s290
        // Predicated region
        $region37: #{tpu_custom_call.1} parent=31 // pred_check
          %p292 = pneg %p109
        $region38: #{tpu_custom_call.1} parent=31 // pred_check_branch
          %294 = sbr.rel (%p292) target = $region40
        $region39: #{tpu_custom_call.1} parent=31 // pred_region
          %s296 = ssub.s32 128, 128
          %297 = vsyncadd %s288, %s296
          %s298 = smul.addr %s18, 128
          %s299 = scalar_lea.hbm %s3, %s298
          %s301 = sshll.u32 %s291, 4
          %s302 = int_to_ptr.vmem [resolvable:$true] %s301
          %304 = dma.vmem_to_hbm [thread:$0]  %s302, 128, %s299, %s288
        $region40: #{tpu_custom_call.1} parent=31 // pred_fallthru
          _
      $region32: #{tpu_custom_call.1} parent=5 // pred_fallthru
        _
      %p305 = scmp.le.s32.totalorder 2, %s13
      // Predicated region
      $region41: #{tpu_custom_call.1} parent=5 // pred_check
        %p306 = pneg %p305
      $region42: #{tpu_custom_call.1} parent=5 // pred_check_branch
        %308 = sbr.rel (%p306) target = $region44
      $region43: #{tpu_custom_call.1} parent=5 // pred_region
        %s309 = ssub.s32 %s13, 2
        // Predicated region
        $region45: #{tpu_custom_call.1} parent=43 // pred_check
          %p310 = pneg %p115
        $region46: #{tpu_custom_call.1} parent=43 // pred_check_branch
          %312 = sbr.rel (%p310) target = $region48
        $region47: #{tpu_custom_call.1} parent=43 // pred_region
          %s313 = sand.u32 %s100, 1
          %s314 = scalar_lea.sflag [#allocation4], %s313
          %s315 = sand.u32 %s100, 1
          %s316 = smul.addr %s315, 8
          %s317 = scalar_lea.vmem [#allocation5], %s316
          %318 = dma.done %s314, 128
        $region48: #{tpu_custom_call.1} parent=43 // pred_fallthru
          _
      $region44: #{tpu_custom_call.1} parent=5 // pred_fallthru
        _
    $region6: #{tpu_custom_call.1} parent=1 // loop_footer
      %s17 = sadd.s32 1, %s13
    $region7: #{tpu_custom_call.1} parent=1 // loop_footer_branch
      %12 = sbr.rel target = $region3
    $region8: #{tpu_custom_call.1} parent=1 // loop_exit
      _
    %319 = vsyncpa [#allocation3], 1
    %s320 = scalar_lea.sflag [#allocation3], 1
    %321 = vsyncpa %s320, 1
    %322 = vsyncpa [#allocation4], 1
    %s323 = scalar_lea.sflag [#allocation4], 1
    %324 = vsyncpa %s323, 1

</llo_original>
